<compile_context>
chip_gen: v7x
topology: tpu7x:2x2x1
jax: 0.10.0
libtpu: 0.0.40
codegen_flags: <defaults>
</compile_context>

<pallas_src>
import functools

import jax
import jax.numpy as jnp
from jax import lax
from jax.experimental import pallas as pl
from jax.experimental.pallas import tpu as pltpu


def _round_up(x, m):
    return (x + m - 1) // m * m


def _conv3x3_kernel(x_ref, w_ref, b_ref, o_ref, *, wp, dilation):
    # x_ref: (Cin, Npad)     bf16  flattened reflection-padded image + slack lanes
    # w_ref: (9, Cout, Cin)  bf16  per-tap weight matrices, tap = kh*3 + kw
    # b_ref: (Cout, 1)       f32   bias (lane-broadcast)
    # o_ref: (Cout, Nacc)    f32   "wide" output rows: Wo valid + junk columns
    cout, nacc = o_ref.shape

    xs = x_ref[...]                                    # (Cin, Npad) bf16, single load
    wt = w_ref[...]                                    # (9, Cout, Cin) bf16
    acc = jnp.zeros((cout, nacc), jnp.float32)
    # 3x3 conv as 9 shifted lane-window matmuls; out[co, h*Wp + w] accumulates
    # sum_{kh,kw,ci} W[tap][co, ci] * xflat[ci, (h + kh*dil)*Wp + (w + kw*dil)].
    for kh in range(3):
        for kw in range(3):
            s = (kh * wp + kw) * dilation
            acc = acc + jnp.dot(wt[kh * 3 + kw], xs[:, s:s + nacc],
                                preferred_element_type=jnp.float32)
    acc = acc + b_ref[...]                             # (Cout,1) broadcasts over lanes
    o_ref[...] = acc.astype(o_ref.dtype)


def conv3x3(x_nchw, weight_oihw, bias, *, padding=1, dilation=1, use_refl=True):
    """Forward pass of Conv3x3 (ReflectionPad2d(padding) + Conv2d(3x3, dilation, bias)).

    x_nchw:      (B, Cin, H, W) float32
    weight_oihw: (Cout, Cin, 3, 3) float32
    bias:        (Cout,) float32
    returns      (B, Cout, H + 2*padding - 2*dilation, W + 2*padding - 2*dilation) float32
    """
    B, Cin, H, W = x_nchw.shape
    Cout = weight_oihw.shape[0]
    Hp, Wp = H + 2 * padding, W + 2 * padding
    Ho, Wo = Hp - 2 * dilation, Wp - 2 * dilation

    # Pad spatial dims (reflect == nn.ReflectionPad2d, constant == ZeroPad2d).
    mode = "reflect" if use_refl else "constant"
    xp = jnp.pad(x_nchw.astype(jnp.float32),
                 ((0, 0), (0, 0), (padding, padding), (padding, padding)),
                 mode=mode)

    # Lane-dense output width (multiple of 128 -> unmasked stores) and enough
    # input slack lanes so that every tap's lane-window slice stays in bounds:
    # max shift = (2*Wp + 2)*dilation.
    nacc = _round_up(Ho * Wp, 128)
    max_shift = (2 * Wp + 2) * dilation
    npad = _round_up(max_shift + nacc, 128)

    # Flatten H,W onto the lane axis, zero-fill the slack, cast to bf16 (MXU).
    x_flat = jnp.pad(xp.reshape(B, Cin, Hp * Wp),
                     ((0, 0), (0, 0), (0, npad - Hp * Wp)))
    x_flat = x_flat.astype(jnp.bfloat16)

    # weight[co, ci, kh, kw] -> w_taps[kh*3 + kw, co, ci]
    w_taps = jnp.transpose(weight_oihw, (2, 3, 0, 1)).reshape(9, Cout, Cin)
    w_taps = w_taps.astype(jnp.bfloat16)
    b2d = bias.reshape(Cout, 1).astype(jnp.float32)

    kernel = functools.partial(_conv3x3_kernel, wp=Wp, dilation=dilation)

    out_wide = pl.pallas_call(
        kernel,
        out_shape=jax.ShapeDtypeStruct((B, Cout, nacc), jnp.float32),
        grid_spec=pltpu.PrefetchScalarGridSpec(
            num_scalar_prefetch=0,
            grid=(B,),
            in_specs=[
                pl.BlockSpec((None, Cin, npad), lambda b: (b, 0, 0)),
                pl.BlockSpec((9, Cout, Cin), lambda b: (0, 0, 0)),
                pl.BlockSpec((Cout, 1), lambda b: (0, 0)),
            ],
            out_specs=pl.BlockSpec((None, Cout, nacc), lambda b: (b, 0, 0)),
        ),
        compiler_params=pltpu.CompilerParams(
            dimension_semantics=("parallel",)),
    )(x_flat, w_taps, b2d)

    # Strip the junk columns; result is already NCHW (no transpose needed).
    out = out_wide[:, :, :Ho * Wp].reshape(B, Cout, Ho, Wp)[:, :, :, :Wo]
    return out


if __name__ == "__main__":
    B, Cin, Cout, H, W = 2, 4, 8, 16, 16

    key = jax.random.PRNGKey(0)
    kx, kwt, kb = jax.random.split(key, 3)

    x = jax.random.normal(kx, (B, Cin, H, W), dtype=jnp.float32)
    fan_in = Cin * 3 * 3
    bound = 1.0 / (fan_in ** 0.5)
    weight = jax.random.uniform(kwt, (Cout, Cin, 3, 3), jnp.float32,
                                minval=-bound, maxval=bound)
    bias = jax.random.uniform(kb, (Cout,), jnp.float32,
                              minval=-bound, maxval=bound)

    out = conv3x3(x, weight, bias)
    out = jax.block_until_ready(out)

    # Reference with the same bf16-quantized operands (kernel uses bf16 MXU
    # inputs with f32 accumulation): reflection pad + VALID conv + bias.
    xq = x.astype(jnp.bfloat16).astype(jnp.float32)
    wq = weight.astype(jnp.bfloat16).astype(jnp.float32)
    xp_ref = jnp.pad(xq, ((0, 0), (0, 0), (1, 1), (1, 1)), mode="reflect")
    ref = lax.conv_general_dilated(
        xp_ref, wq, window_strides=(1, 1), padding="VALID",
        dimension_numbers=("NCHW", "OIHW", "NCHW"),
        preferred_element_type=jnp.float32)
    ref = ref + bias.reshape(1, Cout, 1, 1)

    assert out.shape == (B, Cout, H, W), out.shape
    max_err = float(jnp.max(jnp.abs(out - ref)))
    assert jnp.allclose(out, ref, atol=2e-3, rtol=1e-3), max_err

    print("KERNEL_OK")
</pallas_src>

<mosaic_0001>
module attributes {stable_mosaic.version = 11 : i64} {
  func.func @_conv3x3_kernel(%arg0: i32, %arg1: memref<1x4x512xbf16, #tpu.memory_space<vmem>>, %arg2: memref<9x8x4xbf16, #tpu.memory_space<vmem>>, %arg3: memref<8x1xf32, #tpu.memory_space<vmem>>, %arg4: memref<1x8x384xf32, #tpu.memory_space<vmem>>) attributes {dimension_semantics = [#tpu.dimension_semantics<parallel>], iteration_bounds = array<i64: 2>, scalar_prefetch = 0 : i64, scratch_operands = 0 : i64, tpu.core_type = #tpu.core_type<tc>, window_params = [{transform_indices = @transform_0, window_bounds = array<i64: 1, 4, 512>}, {pipeline_mode = #tpu.pipeline_mode<synchronous>, transform_indices = @transform_1, window_bounds = array<i64: 9, 8, 4>}, {pipeline_mode = #tpu.pipeline_mode<synchronous>, transform_indices = @transform_2, window_bounds = array<i64: 8, 1>}, {transform_indices = @transform_3, window_bounds = array<i64: 1, 8, 384>}]} {
    %c0 = arith.constant 0 : index
    %c0_0 = arith.constant 0 : index
    %c0_1 = arith.constant 0 : index
    %0 = vector.load %arg1[%c0, %c0_0, %c0_1] : memref<1x4x512xbf16, #tpu.memory_space<vmem>>, vector<1x4x512xbf16>
    %1 = vector.shape_cast %0 : vector<1x4x512xbf16> to vector<4x512xbf16>
    %c0_2 = arith.constant 0 : index
    %c0_3 = arith.constant 0 : index
    %c0_4 = arith.constant 0 : index
    %2 = vector.load %arg2[%c0_2, %c0_3, %c0_4] : memref<9x8x4xbf16, #tpu.memory_space<vmem>>, vector<9x8x4xbf16>
    %cst = arith.constant 0.000000e+00 : f32
    %3 = vector.broadcast %cst : f32 to vector<8x384xf32>
    %4 = vector.extract_strided_slice %2 {offsets = [0, 0, 0], sizes = [1, 8, 4], strides = [1, 1, 1]} : vector<9x8x4xbf16> to vector<1x8x4xbf16>
    %5 = vector.shape_cast %4 : vector<1x8x4xbf16> to vector<8x4xbf16>
    %6 = vector.extract_strided_slice %1 {offsets = [0, 0], sizes = [4, 384], strides = [1, 1]} : vector<4x512xbf16> to vector<4x384xbf16>
    %cst_5 = arith.constant dense<0.000000e+00> : vector<8x384xf32>
    %7 = tpu.matmul %5, %6, %cst_5 {dimension_numbers = #tpu.dot_dimension_numbers<[1], [0], [0], [1], [0, 0, 1, 1], [], []>} : vector<8x4xbf16>, vector<4x384xbf16>, vector<8x384xf32> -> vector<8x384xf32>
    %8 = arith.addf %3, %7 : vector<8x384xf32>
    %9 = vector.extract_strided_slice %2 {offsets = [1, 0, 0], sizes = [1, 8, 4], strides = [1, 1, 1]} : vector<9x8x4xbf16> to vector<1x8x4xbf16>
    %10 = vector.shape_cast %9 : vector<1x8x4xbf16> to vector<8x4xbf16>
    %11 = vector.extract_strided_slice %1 {offsets = [0, 1], sizes = [4, 384], strides = [1, 1]} : vector<4x512xbf16> to vector<4x384xbf16>
    %cst_6 = arith.constant dense<0.000000e+00> : vector<8x384xf32>
    %12 = tpu.matmul %10, %11, %cst_6 {dimension_numbers = #tpu.dot_dimension_numbers<[1], [0], [0], [1], [0, 0, 1, 1], [], []>} : vector<8x4xbf16>, vector<4x384xbf16>, vector<8x384xf32> -> vector<8x384xf32>
    %13 = arith.addf %8, %12 : vector<8x384xf32>
    %14 = vector.extract_strided_slice %2 {offsets = [2, 0, 0], sizes = [1, 8, 4], strides = [1, 1, 1]} : vector<9x8x4xbf16> to vector<1x8x4xbf16>
    %15 = vector.shape_cast %14 : vector<1x8x4xbf16> to vector<8x4xbf16>
    %16 = vector.extract_strided_slice %1 {offsets = [0, 2], sizes = [4, 384], strides = [1, 1]} : vector<4x512xbf16> to vector<4x384xbf16>
    %cst_7 = arith.constant dense<0.000000e+00> : vector<8x384xf32>
    %17 = tpu.matmul %15, %16, %cst_7 {dimension_numbers = #tpu.dot_dimension_numbers<[1], [0], [0], [1], [0, 0, 1, 1], [], []>} : vector<8x4xbf16>, vector<4x384xbf16>, vector<8x384xf32> -> vector<8x384xf32>
    %18 = arith.addf %13, %17 : vector<8x384xf32>
    %19 = vector.extract_strided_slice %2 {offsets = [3, 0, 0], sizes = [1, 8, 4], strides = [1, 1, 1]} : vector<9x8x4xbf16> to vector<1x8x4xbf16>
    %20 = vector.shape_cast %19 : vector<1x8x4xbf16> to vector<8x4xbf16>
    %21 = vector.extract_strided_slice %1 {offsets = [0, 18], sizes = [4, 384], strides = [1, 1]} : vector<4x512xbf16> to vector<4x384xbf16>
    %cst_8 = arith.constant dense<0.000000e+00> : vector<8x384xf32>
    %22 = tpu.matmul %20, %21, %cst_8 {dimension_numbers = #tpu.dot_dimension_numbers<[1], [0], [0], [1], [0, 0, 1, 1], [], []>} : vector<8x4xbf16>, vector<4x384xbf16>, vector<8x384xf32> -> vector<8x384xf32>
    %23 = arith.addf %18, %22 : vector<8x384xf32>
    %24 = vector.extract_strided_slice %2 {offsets = [4, 0, 0], sizes = [1, 8, 4], strides = [1, 1, 1]} : vector<9x8x4xbf16> to vector<1x8x4xbf16>
    %25 = vector.shape_cast %24 : vector<1x8x4xbf16> to vector<8x4xbf16>
    %26 = vector.extract_strided_slice %1 {offsets = [0, 19], sizes = [4, 384], strides = [1, 1]} : vector<4x512xbf16> to vector<4x384xbf16>
    %cst_9 = arith.constant dense<0.000000e+00> : vector<8x384xf32>
    %27 = tpu.matmul %25, %26, %cst_9 {dimension_numbers = #tpu.dot_dimension_numbers<[1], [0], [0], [1], [0, 0, 1, 1], [], []>} : vector<8x4xbf16>, vector<4x384xbf16>, vector<8x384xf32> -> vector<8x384xf32>
    %28 = arith.addf %23, %27 : vector<8x384xf32>
    %29 = vector.extract_strided_slice %2 {offsets = [5, 0, 0], sizes = [1, 8, 4], strides = [1, 1, 1]} : vector<9x8x4xbf16> to vector<1x8x4xbf16>
    %30 = vector.shape_cast %29 : vector<1x8x4xbf16> to vector<8x4xbf16>
    %31 = vector.extract_strided_slice %1 {offsets = [0, 20], sizes = [4, 384], strides = [1, 1]} : vector<4x512xbf16> to vector<4x384xbf16>
    %cst_10 = arith.constant dense<0.000000e+00> : vector<8x384xf32>
    %32 = tpu.matmul %30, %31, %cst_10 {dimension_numbers = #tpu.dot_dimension_numbers<[1], [0], [0], [1], [0, 0, 1, 1], [], []>} : vector<8x4xbf16>, vector<4x384xbf16>, vector<8x384xf32> -> vector<8x384xf32>
    %33 = arith.addf %28, %32 : vector<8x384xf32>
    %34 = vector.extract_strided_slice %2 {offsets = [6, 0, 0], sizes = [1, 8, 4], strides = [1, 1, 1]} : vector<9x8x4xbf16> to vector<1x8x4xbf16>
    %35 = vector.shape_cast %34 : vector<1x8x4xbf16> to vector<8x4xbf16>
    %36 = vector.extract_strided_slice %1 {offsets = [0, 36], sizes = [4, 384], strides = [1, 1]} : vector<4x512xbf16> to vector<4x384xbf16>
    %cst_11 = arith.constant dense<0.000000e+00> : vector<8x384xf32>
    %37 = tpu.matmul %35, %36, %cst_11 {dimension_numbers = #tpu.dot_dimension_numbers<[1], [0], [0], [1], [0, 0, 1, 1], [], []>} : vector<8x4xbf16>, vector<4x384xbf16>, vector<8x384xf32> -> vector<8x384xf32>
    %38 = arith.addf %33, %37 : vector<8x384xf32>
    %39 = vector.extract_strided_slice %2 {offsets = [7, 0, 0], sizes = [1, 8, 4], strides = [1, 1, 1]} : vector<9x8x4xbf16> to vector<1x8x4xbf16>
    %40 = vector.shape_cast %39 : vector<1x8x4xbf16> to vector<8x4xbf16>
    %41 = vector.extract_strided_slice %1 {offsets = [0, 37], sizes = [4, 384], strides = [1, 1]} : vector<4x512xbf16> to vector<4x384xbf16>
    %cst_12 = arith.constant dense<0.000000e+00> : vector<8x384xf32>
    %42 = tpu.matmul %40, %41, %cst_12 {dimension_numbers = #tpu.dot_dimension_numbers<[1], [0], [0], [1], [0, 0, 1, 1], [], []>} : vector<8x4xbf16>, vector<4x384xbf16>, vector<8x384xf32> -> vector<8x384xf32>
    %43 = arith.addf %38, %42 : vector<8x384xf32>
    %44 = vector.extract_strided_slice %2 {offsets = [8, 0, 0], sizes = [1, 8, 4], strides = [1, 1, 1]} : vector<9x8x4xbf16> to vector<1x8x4xbf16>
    %45 = vector.shape_cast %44 : vector<1x8x4xbf16> to vector<8x4xbf16>
    %46 = vector.extract_strided_slice %1 {offsets = [0, 38], sizes = [4, 384], strides = [1, 1]} : vector<4x512xbf16> to vector<4x384xbf16>
    %cst_13 = arith.constant dense<0.000000e+00> : vector<8x384xf32>
    %47 = tpu.matmul %45, %46, %cst_13 {dimension_numbers = #tpu.dot_dimension_numbers<[1], [0], [0], [1], [0, 0, 1, 1], [], []>} : vector<8x4xbf16>, vector<4x384xbf16>, vector<8x384xf32> -> vector<8x384xf32>
    %48 = arith.addf %43, %47 : vector<8x384xf32>
    %c0_14 = arith.constant 0 : index
    %c0_15 = arith.constant 0 : index
    %49 = vector.load %arg3[%c0_14, %c0_15] : memref<8x1xf32, #tpu.memory_space<vmem>>, vector<8x1xf32>
    %50 = vector.broadcast %49 : vector<8x1xf32> to vector<8x384xf32>
    %51 = arith.addf %48, %50 : vector<8x384xf32>
    %c0_16 = arith.constant 0 : index
    %c0_17 = arith.constant 0 : index
    %c0_18 = arith.constant 0 : index
    %52 = vector.load %arg4[%c0_16, %c0_17, %c0_18] : memref<1x8x384xf32, #tpu.memory_space<vmem>>, vector<1x8x384xf32>
    %53 = vector.shape_cast %52 : vector<1x8x384xf32> to vector<8x384xf32>
    %54 = vector.shape_cast %51 : vector<8x384xf32> to vector<1x8x384xf32>
    tpu.vector_store %arg4[%c0_16, %c0_17, %c0_18], %54 {strides = array<i32>} : memref<1x8x384xf32, #tpu.memory_space<vmem>>, vector<1x8x384xf32>,
    return
  }
  func.func @transform_0(%arg0: i32) -> (i32, i32, i32) {
    %c0_i32 = arith.constant 0 : i32
    %c0_i32_0 = arith.constant 0 : i32
    %c0_i32_1 = arith.constant 0 : i32
    return %arg0, %c0_i32, %c0_i32_0 : i32, i32, i32
  }
  func.func @transform_1(%arg0: i32) -> (i32, i32, i32) {
    %c0_i32 = arith.constant 0 : i32
    %c0_i32_0 = arith.constant 0 : i32
    %c0_i32_1 = arith.constant 0 : i32
    %c0_i32_2 = arith.constant 0 : i32
    return %c0_i32, %c0_i32_0, %c0_i32_1 : i32, i32, i32
  }
  func.func @transform_2(%arg0: i32) -> (i32, i32) {
    %c0_i32 = arith.constant 0 : i32
    %c0_i32_0 = arith.constant 0 : i32
    %c0_i32_1 = arith.constant 0 : i32
    return %c0_i32, %c0_i32_0 : i32, i32
  }
  func.func @transform_3(%arg0: i32) -> (i32, i32, i32) {
    %c0_i32 = arith.constant 0 : i32
    %c0_i32_0 = arith.constant 0 : i32
    %c0_i32_1 = arith.constant 0 : i32
    return %arg0, %c0_i32, %c0_i32_0 : i32, i32, i32
  }
}

</mosaic_0001>

<llo_original>
// kernel: tpu_custom_call.1
$region0: #{tpu_custom_call.1}
  #allocation0 [shape = 'u32[]', space=smem, size = 0x4, offset = 0x4, fixed_abs, tag = 'smem constant byte address 0x4 - core index']
  #allocation1 [shape = 'u32[144,128]{1,0:T(1,128)}', space=vmem, size = 0x12000, scoped, tag = 'internal scratch']
  %s0 = inlined_call_operand.vmem [shape: bf16[2,4,512], index: 0, kind: input, shape index: {}]
  %s1 = inlined_call_operand.vmem [shape: bf16[9,8,4], index: 1, kind: input, shape index: {}]
  %s2 = inlined_call_operand.vmem [shape: f32[8,1], index: 2, kind: input, shape index: {}]
  %s3 = inlined_call_operand.hbm [shape: f32[2,8,384], index: 3, kind: output, shape index: {}]
  %s4 = sld [smem:[#allocation0]]
  $region45: #{tpu_custom_call.1} parent=0
    _
  %s6 = ssub.s32 1, %s4
  %s7 = scalar_select 0, %s6, %s4
  $region1: #{tpu_custom_call.1} parent=0
    #allocation2 [shape = 'u8[24576]{0}', space=vmem, size = 0x6000, scoped, tag = 'output window, operand 0']
    #allocation3 [shape = 's32[2]{0}', space=sflag, size = 0x8, scoped, tag = 'scoped memory for tpu_custom_call.1']
    %8 = vsyncpa [#allocation3], 0
    %s9 = scalar_lea.sflag [#allocation3], 1
    %10 = vsyncpa %s9, 0
    loop: start=0, step=1, limit=4
    $region2: #{tpu_custom_call.1} parent=1 // loop_pre_header
      _
    $region3: #{tpu_custom_call.1} parent=1 // loop_header
      %s12 = sphi 0, %s16
      %p13 = scmp.ge.s32.totalorder %s12, 4
      %s22 = sphi 0, %s24
      %s25 = sphi 0, %s22
      %s26 = sphi 0, %s25
      %s42 = sphi 0, %s26
      %s46 = sphi 0, %s46
      %s48 = sphi 0, %s46
      %s49 = sphi 0, %s48
      %s63 = sphi 0, %s49
      %s67 = sphi 0, %s67
      %s69 = sphi 0, %s67
      %s70 = sphi 0, %s69
      %s84 = sphi 0, %s70
      %s90 = sphi 0, %s92
      %s93 = sphi 0, %s90
      %s94 = sphi 0, %s93
      %s110 = sphi 0, %s94
    $region4: #{tpu_custom_call.1} parent=1 // loop_header_branch
      %15 = sbr.rel (%p13) target = $region8
    $region5: #{tpu_custom_call.1} parent=1 // loop_body
      %s17 = ssub.s32 %s12, 1
      %s18 = ssub.s32 %s12, 2
      %s19 = sadd.s32 %s12, 1
      %s20 = ssub.s32 %s12, %s19
      %p21 = scmp.eq.s32.totalorder %s20, 0
      %s23 = sadd.s32 %s22, 1
      %s24 = scalar_select %p21, %s22, %s23
      %p27 = pneg %p21
      %p28 = scmp.eq.s32.totalorder %s12, 1
      %p29 = por %p27, %p28
      %p30 = scmp.ne.s32.totalorder %s22, %s25
      %p31 = scmp.eq.s32.totalorder %s12, 0
      %p32 = por %p30, %p31
      %p33 = scmp.ne.s32.totalorder %s22, %s25
      %p34 = scmp.eq.s32.totalorder %s17, 1
      %p35 = por %p33, %p34
      %p36 = scmp.ne.s32.totalorder %s25, %s26
      %p37 = scmp.eq.s32.totalorder %s17, 0
      %p38 = por %p36, %p37
      %p39 = scmp.ne.s32.totalorder %s25, %s26
      %p40 = scmp.eq.s32.totalorder %s18, 1
      %p41 = por %p39, %p40
      %p43 = scmp.ne.s32.totalorder %s26, %s42
      %p44 = scmp.eq.s32.totalorder %s18, 0
      %p45 = por %p43, %p44
      %s47 = sadd.s32 %s46, 1
      %p50 = scmp.eq.s32.totalorder %s12, 1
      %p51 = scmp.ne.s32.totalorder %s46, %s48
      %p52 = scmp.eq.s32.totalorder %s12, 0
      %p53 = por %p51, %p52
      %p54 = scmp.ne.s32.totalorder %s46, %s48
      %p55 = scmp.eq.s32.totalorder %s17, 1
      %p56 = por %p54, %p55
      %p57 = scmp.ne.s32.totalorder %s48, %s49
      %p58 = scmp.eq.s32.totalorder %s17, 0
      %p59 = por %p57, %p58
      %p60 = scmp.ne.s32.totalorder %s48, %s49
      %p61 = scmp.eq.s32.totalorder %s18, 1
      %p62 = por %p60, %p61
      %p64 = scmp.ne.s32.totalorder %s49, %s63
      %p65 = scmp.eq.s32.totalorder %s18, 0
      %p66 = por %p64, %p65
      %s68 = sadd.s32 %s67, 1
      %p71 = scmp.eq.s32.totalorder %s12, 1
      %p72 = scmp.ne.s32.totalorder %s67, %s69
      %p73 = scmp.eq.s32.totalorder %s12, 0
      %p74 = por %p72, %p73
      %p75 = scmp.ne.s32.totalorder %s67, %s69
      %p76 = scmp.eq.s32.totalorder %s17, 1
      %p77 = por %p75, %p76
      %p78 = scmp.ne.s32.totalorder %s69, %s70
      %p79 = scmp.eq.s32.totalorder %s17, 0
      %p80 = por %p78, %p79
      %p81 = scmp.ne.s32.totalorder %s69, %s70
      %p82 = scmp.eq.s32.totalorder %s18, 1
      %p83 = por %p81, %p82
      %p85 = scmp.ne.s32.totalorder %s70, %s84
      %p86 = scmp.eq.s32.totalorder %s18, 0
      %p87 = por %p85, %p86
      %s88 = ssub.s32 %s12, %s19
      %p89 = scmp.eq.s32.totalorder %s88, 0
      %s91 = sadd.s32 %s90, 1
      %s92 = scalar_select %p89, %s90, %s91
      %p95 = pneg %p89
      %p96 = scmp.eq.s32.totalorder %s12, 1
      %p97 = por %p95, %p96
      %p98 = scmp.ne.s32.totalorder %s90, %s93
      %p99 = scmp.eq.s32.totalorder %s12, 0
      %p100 = por %p98, %p99
      %p101 = scmp.ne.s32.totalorder %s90, %s93
      %p102 = scmp.eq.s32.totalorder %s17, 1
      %p103 = por %p101, %p102
      %p104 = scmp.ne.s32.totalorder %s93, %s94
      %p105 = scmp.eq.s32.totalorder %s17, 0
      %p106 = por %p104, %p105
      %p107 = scmp.ne.s32.totalorder %s93, %s94
      %p108 = scmp.eq.s32.totalorder %s18, 1
      %p109 = por %p107, %p108
      %p111 = scmp.ne.s32.totalorder %s94, %s110
      %p112 = scmp.eq.s32.totalorder %s18, 0
      %p113 = por %p111, %p112
      %p114 = scmp.le.s32.totalorder 1, %s12
      %p115 = scmp.lt.s32.totalorder %s12, 3
      %p116 = pnand %p114, %p115
      %p117 = pneg %p116
      // Predicated region
      $region9: #{tpu_custom_call.1} parent=5 // pred_check
        _
      $region10: #{tpu_custom_call.1} parent=5 // pred_check_branch
        %119 = sbr.rel (%p116) target = $region12
      $region11: #{tpu_custom_call.1} parent=5 // pred_region
        %s120 = ssub.s32 %s12, 1
        // Predicated region
        $region13: #{tpu_custom_call.1} parent=11 // pred_check
          %p121 = pneg %p59
        $region14: #{tpu_custom_call.1} parent=11 // pred_check_branch
          %123 = sbr.rel (%p121) target = $region16
        $region15: #{tpu_custom_call.1} parent=11 // pred_region
          _
        $region16: #{tpu_custom_call.1} parent=11 // pred_fallthru
          _
        // Predicated region
        $region17: #{tpu_custom_call.1} parent=11 // pred_check
          %p124 = pneg %p80
        $region18: #{tpu_custom_call.1} parent=11 // pred_check_branch
          %126 = sbr.rel (%p124) target = $region20
        $region19: #{tpu_custom_call.1} parent=11 // pred_region
          _
        $region20: #{tpu_custom_call.1} parent=11 // pred_fallthru
          _
      $region12: #{tpu_custom_call.1} parent=5 // pred_fallthru
        _
      %p127 = scmp.lt.s32.totalorder %s12, 2
      // Predicated region
      $region21: #{tpu_custom_call.1} parent=5 // pred_check
        %p128 = pneg %p127
      $region22: #{tpu_custom_call.1} parent=5 // pred_check_branch
        %130 = sbr.rel (%p128) target = $region24
      $region23: #{tpu_custom_call.1} parent=5 // pred_region
        // Predicated region
        $region25: #{tpu_custom_call.1} parent=23 // pred_check
          %p131 = pneg %p32
        $region26: #{tpu_custom_call.1} parent=23 // pred_check_branch
          %133 = sbr.rel (%p131) target = $region28
        $region27: #{tpu_custom_call.1} parent=23 // pred_region
          %p134 = scmp.lt.s32.totalorder %s12, 1
          %s135 = scalar_select %p134, %s12, 1
          %s136 = smul.addr %s135, 4
          %s137 = smul.addr %s136, 2
          %s138 = scalar_lea.vmem %s0, %s137
        $region28: #{tpu_custom_call.1} parent=23 // pred_fallthru
          _
      $region24: #{tpu_custom_call.1} parent=5 // pred_fallthru
        _
      %p139 = scmp.le.s32.totalorder 1, %s12
      %p140 = scmp.lt.s32.totalorder %s12, 3
      %p141 = pnand %p139, %p140
      %p142 = pneg %p141
      // Predicated region
      $region29: #{tpu_custom_call.1} parent=5 // pred_check
        _
      $region30: #{tpu_custom_call.1} parent=5 // pred_check_branch
        %144 = sbr.rel (%p141) target = $region32
      $region31: #{tpu_custom_call.1} parent=5 // pred_region
        %s145 = ssub.s32 %s12, 1
        %p146 = scmp.lt.s32.totalorder %s17, 1
        %s147 = scalar_select %p146, %s17, 1
        %s148 = smul.addr %s147, 4
        %s149 = smul.addr %s148, 2
        %s150 = scalar_lea.vmem %s0, %s149
        %p151 = pneg %p38
        %p152 = pneg %p35
        %p153 = pneg %p59
        %p154 = pneg %p56
        %p155 = pneg %p80
        %p156 = pneg %p77
        %p157 = pneg %p106
        %p158 = pneg %p103
        %s159 = sand.u32 %s93, 1
        %s160 = scalar_lea.sflag [#allocation3], %s159
        %s161 = sand.u32 %s93, 1
        %s162 = smul.addr %s161, 24
        %s163 = scalar_lea.vmem [#allocation2], %s162
        %p164 = scmp.lt.s32.totalorder %s17, 1
        %s165 = scalar_select %p164, %s17, 1
        %s166 = smul.addr %s165, 4
        %s167 = smul.addr %s166, 2
        %s168 = scalar_lea.vmem %s0, %s167
        %v170 = vld [vmem:[%s168] sm:$0xff]
        %v171 = vld [vmem:[%s1] sm:$0xf]
        %v172 = vld [vmem:[%s1 + $0x4] sm:$0xf]
        %v173 = vld [vmem:[%s1 + $0x8] sm:$0xf]
        %v174 = vld [vmem:[%s1 + $0xc] sm:$0xf]
        %v175 = vld [vmem:[%s1 + $0x10] sm:$0xf]
        %v176 = vld [vmem:[%s1 + $0x14] sm:$0xf]
        %v177 = vld [vmem:[%s1 + $0x18] sm:$0xf]
        %v178 = vld [vmem:[%s1 + $0x1c] sm:$0xf]
        %v179 = vld [vmem:[%s1 + $0x20] sm:$0xf]
        %v181 = vcombine.high %v170, %v170
        %v183 = vunpack.c.l.s4 1983009808
        %v184 = vunpack.c.0.s8 %v183
        %v185 = vlaneseq
        %v186 = vshrl.u32 %v185, 7
        %v187 = vsub.s32 %v184, %v186
        %v188 = vrot.slane %v170, %v187
        %v190 = vunpack.c.l.s4 1983009808
        %v191 = vunpack.c.0.s8 %v190
        %v192 = vlaneseq
        %v193 = vshrl.u32 %v192, 7
        %v194 = vsub.s32 %v191, %v193
        %v195 = vrot.slane %v181, %v194
        %v196 = vcombine.high %v188, %v188
        %v197 = vcombine.high %v195, %v195
        %198 = vrot.lane.b32.xlu0 %v188, 127
        %v199 = vpop.permute.xlu0 %198
        %200 = vrot.lane.b32.xlu0 %v196, 127
        %v201 = vpop.permute.xlu0 %200
        %202 = vrot.lane.b32.xlu0 %v195, 127
        %v203 = vpop.permute.xlu0 %202
        %204 = vrot.lane.b32.xlu0 %v197, 127
        %v205 = vpop.permute.xlu0 %204
        %vm206 = vcmask 1039360
        %v207 = vsel %vm206, %v199, %v201
        %v208 = vsel %vm206, %v201, %v203
        %v209 = vsel %vm206, %v203, %v205
        %vm210 = vcmask 31744
        %v212 = vsel %vm210, %v172, 0
        %vm214 = vcmask 1041408
        %v216 = vsel %vm214, %v207, 0
        %v219 = vsel %vm214, %v208, 0
        %v222 = vsel %vm214, %v209, 0
        %224 = vmatprep.subr.bf16.mxu0 %v219
        %225 = vmatpush1.bf16.msra.mxu0 %v216
        %226 = vmatprep.subr.bf16.mxu0 0
        %227 = vmatpush1.bf16.msra.mxu0 0
        %228 = vmatprep.subr.bf16.mxu0 0
        %229 = vmatpush1.bf16.msra.mxu0 0
        %230 = vmatprep.subr.bf16.mxu0 0
        %231 = vmatpush1.bf16.msra.mxu0 0
        %232 = vmatprep.subr.bf16.mxu0 0
        %233 = vmatpush1.bf16.msra.mxu0 0
        %234 = vmatprep.subr.bf16.mxu0 0
        %235 = vmatpush1.bf16.msra.mxu0 0
        %236 = vmatprep.subr.bf16.mxu0 0
        %237 = vmatpush1.bf16.msra.mxu0 0
        %238 = vmatprep.subr.bf16.mxu0 0
        %239 = vmatpush1.bf16.msra.mxu0 0
        %240 = vmatprep.subr.bf16.mxu0 0
        %241 = vmatpush1.bf16.msra.mxu0 0
        %242 = vmatprep.subr.bf16.mxu0 0
        %243 = vmatpush1.bf16.msra.mxu0 0
        %244 = vmatprep.subr.bf16.mxu0 0
        %245 = vmatpush1.bf16.msra.mxu0 0
        %246 = vmatprep.subr.bf16.mxu0 0
        %247 = vmatpush1.bf16.msra.mxu0 0
        %248 = vmatprep.subr.bf16.mxu0 0
        %249 = vmatpush1.bf16.msra.mxu0 0
        %250 = vmatprep.subr.bf16.mxu0 0
        %251 = vmatpush1.bf16.msra.mxu0 0
        %252 = vmatprep.subr.bf16.mxu0 0
        %253 = vmatpush1.bf16.msra.mxu0 0
        %254 = vmatprep.subr.bf16.mxu0 0
        %255 = vmatpush1.bf16.msra.mxu0 0
        %256 = vmatprep.mubr.bf16.mxu0 0
        %257 = vmatmul.mubr.bf16.gmra.mrb[0].mxu0 %v212
        %v258 = vpop.f32.mrb[0].mxu0
        %v259 = vadd.f32 0.0, %v258
        %v260 = vpop.f32.mrb[0].mxu0
        %v261 = vadd.f32 0.0, %v260
        %v262 = vpop.f32.mrb[0].mxu0
        %v263 = vpop.f32.mrb[0].mxu0
        %264 = vdwg.mxu0
        %265 = vmatprep.subr.bf16.mxu0 0
        %266 = vmatpush1.bf16.msra.mxu0 %v222
        %267 = vmatprep.subr.bf16.mxu0 0
        %268 = vmatpush1.bf16.msra.mxu0 0
        %269 = vmatprep.subr.bf16.mxu0 0
        %270 = vmatpush1.bf16.msra.mxu0 0
        %271 = vmatprep.subr.bf16.mxu0 0
        %272 = vmatpush1.bf16.msra.mxu0 0
        %273 = vmatprep.subr.bf16.mxu0 0
        %274 = vmatpush1.bf16.msra.mxu0 0
        %275 = vmatprep.subr.bf16.mxu0 0
        %276 = vmatpush1.bf16.msra.mxu0 0
        %277 = vmatprep.subr.bf16.mxu0 0
        %278 = vmatpush1.bf16.msra.mxu0 0
        %279 = vmatprep.subr.bf16.mxu0 0
        %280 = vmatpush1.bf16.msra.mxu0 0
        %281 = vmatprep.subr.bf16.mxu0 0
        %282 = vmatpush1.bf16.msra.mxu0 0
        %283 = vmatprep.subr.bf16.mxu0 0
        %284 = vmatpush1.bf16.msra.mxu0 0
        %285 = vmatprep.subr.bf16.mxu0 0
        %286 = vmatpush1.bf16.msra.mxu0 0
        %287 = vmatprep.subr.bf16.mxu0 0
        %288 = vmatpush1.bf16.msra.mxu0 0
        %289 = vmatprep.subr.bf16.mxu0 0
        %290 = vmatpush1.bf16.msra.mxu0 0
        %291 = vmatprep.subr.bf16.mxu0 0
        %292 = vmatpush1.bf16.msra.mxu0 0
        %293 = vmatprep.subr.bf16.mxu0 0
        %294 = vmatpush1.bf16.msra.mxu0 0
        %295 = vmatprep.subr.bf16.mxu0 0
        %296 = vmatpush1.bf16.msra.mxu0 0
        %297 = vmatprep.mubr.bf16.mxu0 0
        %298 = vmatmul.mubr.bf16.gmra.mrb[0].mxu0 %v212
        %v299 = vpop.f32.mrb[0].mxu0
        %v300 = vadd.f32 0.0, %v299
        %v301 = vpop.f32.mrb[0].mxu0
        %v302 = vpop.f32.mrb[0].mxu0
        %v303 = vpop.f32.mrb[0].mxu0
        %304 = vdwg.mxu0
        %v306 = vsel %vm210, %v171, 0
        %v309 = vsel %vm214, %v188, 0
        %v312 = vsel %vm214, %v196, 0
        %v315 = vsel %vm214, %v195, 0
        %317 = vmatprep.subr.bf16.mxu0 %v312
        %318 = vmatpush1.bf16.msra.mxu0 %v309
        %319 = vmatprep.subr.bf16.mxu0 0
        %320 = vmatpush1.bf16.msra.mxu0 0
        %321 = vmatprep.subr.bf16.mxu0 0
        %322 = vmatpush1.bf16.msra.mxu0 0
        %323 = vmatprep.subr.bf16.mxu0 0
        %324 = vmatpush1.bf16.msra.mxu0 0
        %325 = vmatprep.subr.bf16.mxu0 0
        %326 = vmatpush1.bf16.msra.mxu0 0
        %327 = vmatprep.subr.bf16.mxu0 0
        %328 = vmatpush1.bf16.msra.mxu0 0
        %329 = vmatprep.subr.bf16.mxu0 0
        %330 = vmatpush1.bf16.msra.mxu0 0
        %331 = vmatprep.subr.bf16.mxu0 0
        %332 = vmatpush1.bf16.msra.mxu0 0
        %333 = vmatprep.subr.bf16.mxu0 0
        %334 = vmatpush1.bf16.msra.mxu0 0
        %335 = vmatprep.subr.bf16.mxu0 0
        %336 = vmatpush1.bf16.msra.mxu0 0
        %337 = vmatprep.subr.bf16.mxu0 0
        %338 = vmatpush1.bf16.msra.mxu0 0
        %339 = vmatprep.subr.bf16.mxu0 0
        %340 = vmatpush1.bf16.msra.mxu0 0
        %341 = vmatprep.subr.bf16.mxu0 0
        %342 = vmatpush1.bf16.msra.mxu0 0
        %343 = vmatprep.subr.bf16.mxu0 0
        %344 = vmatpush1.bf16.msra.mxu0 0
        %345 = vmatprep.subr.bf16.mxu0 0
        %346 = vmatpush1.bf16.msra.mxu0 0
        %347 = vmatprep.subr.bf16.mxu0 0
        %348 = vmatpush1.bf16.msra.mxu0 0
        %349 = vmatprep.mubr.bf16.mxu0 0
        %350 = vmatmul.mubr.bf16.gmra.mrb[0].mxu0 %v306
        %v351 = vpop.f32.mrb[0].mxu0
        %v352 = vadd.f32 %v259, %v351
        %v353 = vpop.f32.mrb[0].mxu0
        %v354 = vadd.f32 %v261, %v353
        %v355 = vpop.f32.mrb[0].mxu0
        %v356 = vpop.f32.mrb[0].mxu0
        %357 = vdwg.mxu0
        %358 = vmatprep.subr.bf16.mxu0 0
        %359 = vmatpush1.bf16.msra.mxu0 %v315
        %360 = vmatprep.subr.bf16.mxu0 0
        %361 = vmatpush1.bf16.msra.mxu0 0
        %362 = vmatprep.subr.bf16.mxu0 0
        %363 = vmatpush1.bf16.msra.mxu0 0
        %364 = vmatprep.subr.bf16.mxu0 0
        %365 = vmatpush1.bf16.msra.mxu0 0
        %366 = vmatprep.subr.bf16.mxu0 0
        %367 = vmatpush1.bf16.msra.mxu0 0
        %368 = vmatprep.subr.bf16.mxu0 0
        %369 = vmatpush1.bf16.msra.mxu0 0
        %370 = vmatprep.subr.bf16.mxu0 0
        %371 = vmatpush1.bf16.msra.mxu0 0
        %372 = vmatprep.subr.bf16.mxu0 0
        %373 = vmatpush1.bf16.msra.mxu0 0
        %374 = vmatprep.subr.bf16.mxu0 0
        %375 = vmatpush1.bf16.msra.mxu0 0
        %376 = vmatprep.subr.bf16.mxu0 0
        %377 = vmatpush1.bf16.msra.mxu0 0
        %378 = vmatprep.subr.bf16.mxu0 0
        %379 = vmatpush1.bf16.msra.mxu0 0
        %380 = vmatprep.subr.bf16.mxu0 0
        %381 = vmatpush1.bf16.msra.mxu0 0
        %382 = vmatprep.subr.bf16.mxu0 0
        %383 = vmatpush1.bf16.msra.mxu0 0
        %384 = vmatprep.subr.bf16.mxu0 0
        %385 = vmatpush1.bf16.msra.mxu0 0
        %386 = vmatprep.subr.bf16.mxu0 0
        %387 = vmatpush1.bf16.msra.mxu0 0
        %388 = vmatprep.subr.bf16.mxu0 0
        %389 = vmatpush1.bf16.msra.mxu0 0
        %390 = vmatprep.mubr.bf16.mxu0 0
        %391 = vmatmul.mubr.bf16.gmra.mrb[0].mxu0 %v306
        %v392 = vpop.f32.mrb[0].mxu0
        %v393 = vadd.f32 %v300, %v392
        %v394 = vpop.f32.mrb[0].mxu0
        %v395 = vpop.f32.mrb[0].mxu0
        %v396 = vpop.f32.mrb[0].mxu0
        %397 = vdwg.mxu0
        %398 = vrot.lane.b32.xlu0 %v188, 126
        %v399 = vpop.permute.xlu0 %398
        %400 = vrot.lane.b32.xlu0 %v196, 126
        %v401 = vpop.permute.xlu0 %400
        %402 = vrot.lane.b32.xlu0 %v195, 126
        %v403 = vpop.permute.xlu0 %402
        %404 = vrot.lane.b32.xlu0 %v197, 126
        %v405 = vpop.permute.xlu0 %404
        %vm406 = vcmask 1031168
        %v407 = vsel %vm406, %v399, %v401
        %v408 = vsel %vm406, %v401, %v403
        %v409 = vsel %vm406, %v403, %v405
        %v411 = vsel %vm210, %v173, 0
        %v414 = vsel %vm214, %v407, 0
        %v417 = vsel %vm214, %v408, 0
        %v420 = vsel %vm214, %v409, 0
        %422 = vmatprep.subr.bf16.mxu0 %v417
        %423 = vmatpush1.bf16.msra.mxu0 %v414
        %424 = vmatprep.subr.bf16.mxu0 0
        %425 = vmatpush1.bf16.msra.mxu0 0
        %426 = vmatprep.subr.bf16.mxu0 0
        %427 = vmatpush1.bf16.msra.mxu0 0
        %428 = vmatprep.subr.bf16.mxu0 0
        %429 = vmatpush1.bf16.msra.mxu0 0
        %430 = vmatprep.subr.bf16.mxu0 0
        %431 = vmatpush1.bf16.msra.mxu0 0
        %432 = vmatprep.subr.bf16.mxu0 0
        %433 = vmatpush1.bf16.msra.mxu0 0
        %434 = vmatprep.subr.bf16.mxu0 0
        %435 = vmatpush1.bf16.msra.mxu0 0
        %436 = vmatprep.subr.bf16.mxu0 0
        %437 = vmatpush1.bf16.msra.mxu0 0
        %438 = vmatprep.subr.bf16.mxu0 0
        %439 = vmatpush1.bf16.msra.mxu0 0
        %440 = vmatprep.subr.bf16.mxu0 0
        %441 = vmatpush1.bf16.msra.mxu0 0
        %442 = vmatprep.subr.bf16.mxu0 0
        %443 = vmatpush1.bf16.msra.mxu0 0
        %444 = vmatprep.subr.bf16.mxu0 0
        %445 = vmatpush1.bf16.msra.mxu0 0
        %446 = vmatprep.subr.bf16.mxu0 0
        %447 = vmatpush1.bf16.msra.mxu0 0
        %448 = vmatprep.subr.bf16.mxu0 0
        %449 = vmatpush1.bf16.msra.mxu0 0
        %450 = vmatprep.subr.bf16.mxu0 0
        %451 = vmatpush1.bf16.msra.mxu0 0
        %452 = vmatprep.subr.bf16.mxu0 0
        %453 = vmatpush1.bf16.msra.mxu0 0
        %454 = vmatprep.mubr.bf16.mxu0 0
        %455 = vmatmul.mubr.bf16.gmra.mrb[0].mxu0 %v411
        %v456 = vpop.f32.mrb[0].mxu0
        %v457 = vadd.f32 0.0, %v456
        %v458 = vpop.f32.mrb[0].mxu0
        %v459 = vadd.f32 0.0, %v458
        %v460 = vpop.f32.mrb[0].mxu0
        %v461 = vpop.f32.mrb[0].mxu0
        %462 = vdwg.mxu0
        %463 = vmatprep.subr.bf16.mxu0 0
        %464 = vmatpush1.bf16.msra.mxu0 %v420
        %465 = vmatprep.subr.bf16.mxu0 0
        %466 = vmatpush1.bf16.msra.mxu0 0
        %467 = vmatprep.subr.bf16.mxu0 0
        %468 = vmatpush1.bf16.msra.mxu0 0
        %469 = vmatprep.subr.bf16.mxu0 0
        %470 = vmatpush1.bf16.msra.mxu0 0
        %471 = vmatprep.subr.bf16.mxu0 0
        %472 = vmatpush1.bf16.msra.mxu0 0
        %473 = vmatprep.subr.bf16.mxu0 0
        %474 = vmatpush1.bf16.msra.mxu0 0
        %475 = vmatprep.subr.bf16.mxu0 0
        %476 = vmatpush1.bf16.msra.mxu0 0
        %477 = vmatprep.subr.bf16.mxu0 0
        %478 = vmatpush1.bf16.msra.mxu0 0
        %479 = vmatprep.subr.bf16.mxu0 0
        %480 = vmatpush1.bf16.msra.mxu0 0
        %481 = vmatprep.subr.bf16.mxu0 0
        %482 = vmatpush1.bf16.msra.mxu0 0
        %483 = vmatprep.subr.bf16.mxu0 0
        %484 = vmatpush1.bf16.msra.mxu0 0
        %485 = vmatprep.subr.bf16.mxu0 0
        %486 = vmatpush1.bf16.msra.mxu0 0
        %487 = vmatprep.subr.bf16.mxu0 0
        %488 = vmatpush1.bf16.msra.mxu0 0
        %489 = vmatprep.subr.bf16.mxu0 0
        %490 = vmatpush1.bf16.msra.mxu0 0
        %491 = vmatprep.subr.bf16.mxu0 0
        %492 = vmatpush1.bf16.msra.mxu0 0
        %493 = vmatprep.subr.bf16.mxu0 0
        %494 = vmatpush1.bf16.msra.mxu0 0
        %495 = vmatprep.mubr.bf16.mxu0 0
        %496 = vmatmul.mubr.bf16.gmra.mrb[0].mxu0 %v411
        %v497 = vpop.f32.mrb[0].mxu0
        %v498 = vadd.f32 0.0, %v497
        %v499 = vpop.f32.mrb[0].mxu0
        %v500 = vpop.f32.mrb[0].mxu0
        %v501 = vpop.f32.mrb[0].mxu0
        %502 = vdwg.mxu0
        %v503 = vadd.f32 %v352, %v457
        %v504 = vadd.f32 %v354, %v459
        %v505 = vadd.f32 %v393, %v498
        %506 = vrot.lane.b32.xlu0 %v188, 110
        %v507 = vpop.permute.xlu0 %506
        %508 = vrot.lane.b32.xlu0 %v196, 110
        %v509 = vpop.permute.xlu0 %508
        %510 = vrot.lane.b32.xlu0 %v195, 110
        %v511 = vpop.permute.xlu0 %510
        %512 = vrot.lane.b32.xlu0 %v197, 110
        %v513 = vpop.permute.xlu0 %512
        %vm514 = vcmask 900096
        %v515 = vsel %vm514, %v507, %v509
        %v516 = vsel %vm514, %v509, %v511
        %v517 = vsel %vm514, %v511, %v513
        %v519 = vsel %vm210, %v174, 0
        %v522 = vsel %vm214, %v515, 0
        %v525 = vsel %vm214, %v516, 0
        %v528 = vsel %vm214, %v517, 0
        %530 = vmatprep.subr.bf16.mxu0 %v525
        %531 = vmatpush1.bf16.msra.mxu0 %v522
        %532 = vmatprep.subr.bf16.mxu0 0
        %533 = vmatpush1.bf16.msra.mxu0 0
        %534 = vmatprep.subr.bf16.mxu0 0
        %535 = vmatpush1.bf16.msra.mxu0 0
        %536 = vmatprep.subr.bf16.mxu0 0
        %537 = vmatpush1.bf16.msra.mxu0 0
        %538 = vmatprep.subr.bf16.mxu0 0
        %539 = vmatpush1.bf16.msra.mxu0 0
        %540 = vmatprep.subr.bf16.mxu0 0
        %541 = vmatpush1.bf16.msra.mxu0 0
        %542 = vmatprep.subr.bf16.mxu0 0
        %543 = vmatpush1.bf16.msra.mxu0 0
        %544 = vmatprep.subr.bf16.mxu0 0
        %545 = vmatpush1.bf16.msra.mxu0 0
        %546 = vmatprep.subr.bf16.mxu0 0
        %547 = vmatpush1.bf16.msra.mxu0 0
        %548 = vmatprep.subr.bf16.mxu0 0
        %549 = vmatpush1.bf16.msra.mxu0 0
        %550 = vmatprep.subr.bf16.mxu0 0
        %551 = vmatpush1.bf16.msra.mxu0 0
        %552 = vmatprep.subr.bf16.mxu0 0
        %553 = vmatpush1.bf16.msra.mxu0 0
        %554 = vmatprep.subr.bf16.mxu0 0
        %555 = vmatpush1.bf16.msra.mxu0 0
        %556 = vmatprep.subr.bf16.mxu0 0
        %557 = vmatpush1.bf16.msra.mxu0 0
        %558 = vmatprep.subr.bf16.mxu0 0
        %559 = vmatpush1.bf16.msra.mxu0 0
        %560 = vmatprep.subr.bf16.mxu0 0
        %561 = vmatpush1.bf16.msra.mxu0 0
        %562 = vmatprep.mubr.bf16.mxu0 0
        %563 = vmatmul.mubr.bf16.gmra.mrb[0].mxu0 %v519
        %v564 = vpop.f32.mrb[0].mxu0
        %v565 = vadd.f32 0.0, %v564
        %v566 = vpop.f32.mrb[0].mxu0
        %v567 = vadd.f32 0.0, %v566
        %v568 = vpop.f32.mrb[0].mxu0
        %v569 = vpop.f32.mrb[0].mxu0
        %570 = vdwg.mxu0
        %571 = vmatprep.subr.bf16.mxu0 0
        %572 = vmatpush1.bf16.msra.mxu0 %v528
        %573 = vmatprep.subr.bf16.mxu0 0
        %574 = vmatpush1.bf16.msra.mxu0 0
        %575 = vmatprep.subr.bf16.mxu0 0
        %576 = vmatpush1.bf16.msra.mxu0 0
        %577 = vmatprep.subr.bf16.mxu0 0
        %578 = vmatpush1.bf16.msra.mxu0 0
        %579 = vmatprep.subr.bf16.mxu0 0
        %580 = vmatpush1.bf16.msra.mxu0 0
        %581 = vmatprep.subr.bf16.mxu0 0
        %582 = vmatpush1.bf16.msra.mxu0 0
        %583 = vmatprep.subr.bf16.mxu0 0
        %584 = vmatpush1.bf16.msra.mxu0 0
        %585 = vmatprep.subr.bf16.mxu0 0
        %586 = vmatpush1.bf16.msra.mxu0 0
        %587 = vmatprep.subr.bf16.mxu0 0
        %588 = vmatpush1.bf16.msra.mxu0 0
        %589 = vmatprep.subr.bf16.mxu0 0
        %590 = vmatpush1.bf16.msra.mxu0 0
        %591 = vmatprep.subr.bf16.mxu0 0
        %592 = vmatpush1.bf16.msra.mxu0 0
        %593 = vmatprep.subr.bf16.mxu0 0
        %594 = vmatpush1.bf16.msra.mxu0 0
        %595 = vmatprep.subr.bf16.mxu0 0
        %596 = vmatpush1.bf16.msra.mxu0 0
        %597 = vmatprep.subr.bf16.mxu0 0
        %598 = vmatpush1.bf16.msra.mxu0 0
        %599 = vmatprep.subr.bf16.mxu0 0
        %600 = vmatpush1.bf16.msra.mxu0 0
        %601 = vmatprep.subr.bf16.mxu0 0
        %602 = vmatpush1.bf16.msra.mxu0 0
        %603 = vmatprep.mubr.bf16.mxu0 0
        %604 = vmatmul.mubr.bf16.gmra.mrb[0].mxu0 %v519
        %v605 = vpop.f32.mrb[0].mxu0
        %v606 = vadd.f32 0.0, %v605
        %v607 = vpop.f32.mrb[0].mxu0
        %v608 = vpop.f32.mrb[0].mxu0
        %v609 = vpop.f32.mrb[0].mxu0
        %610 = vdwg.mxu0
        %v611 = vadd.f32 %v503, %v565
        %v612 = vadd.f32 %v504, %v567
        %v613 = vadd.f32 %v505, %v606
        %614 = vrot.lane.b32.xlu0 %v188, 109
        %v615 = vpop.permute.xlu0 %614
        %616 = vrot.lane.b32.xlu0 %v196, 109
        %v617 = vpop.permute.xlu0 %616
        %618 = vrot.lane.b32.xlu0 %v195, 109
        %v619 = vpop.permute.xlu0 %618
        %620 = vrot.lane.b32.xlu0 %v197, 109
        %v621 = vpop.permute.xlu0 %620
        %vm622 = vcmask 891904
        %v623 = vsel %vm622, %v615, %v617
        %v624 = vsel %vm622, %v617, %v619
        %v625 = vsel %vm622, %v619, %v621
        %v627 = vsel %vm210, %v175, 0
        %v630 = vsel %vm214, %v623, 0
        %v633 = vsel %vm214, %v624, 0
        %v636 = vsel %vm214, %v625, 0
        %638 = vmatprep.subr.bf16.mxu0 %v633
        %639 = vmatpush1.bf16.msra.mxu0 %v630
        %640 = vmatprep.subr.bf16.mxu0 0
        %641 = vmatpush1.bf16.msra.mxu0 0
        %642 = vmatprep.subr.bf16.mxu0 0
        %643 = vmatpush1.bf16.msra.mxu0 0
        %644 = vmatprep.subr.bf16.mxu0 0
        %645 = vmatpush1.bf16.msra.mxu0 0
        %646 = vmatprep.subr.bf16.mxu0 0
        %647 = vmatpush1.bf16.msra.mxu0 0
        %648 = vmatprep.subr.bf16.mxu0 0
        %649 = vmatpush1.bf16.msra.mxu0 0
        %650 = vmatprep.subr.bf16.mxu0 0
        %651 = vmatpush1.bf16.msra.mxu0 0
        %652 = vmatprep.subr.bf16.mxu0 0
        %653 = vmatpush1.bf16.msra.mxu0 0
        %654 = vmatprep.subr.bf16.mxu0 0
        %655 = vmatpush1.bf16.msra.mxu0 0
        %656 = vmatprep.subr.bf16.mxu0 0
        %657 = vmatpush1.bf16.msra.mxu0 0
        %658 = vmatprep.subr.bf16.mxu0 0
        %659 = vmatpush1.bf16.msra.mxu0 0
        %660 = vmatprep.subr.bf16.mxu0 0
        %661 = vmatpush1.bf16.msra.mxu0 0
        %662 = vmatprep.subr.bf16.mxu0 0
        %663 = vmatpush1.bf16.msra.mxu0 0
        %664 = vmatprep.subr.bf16.mxu0 0
        %665 = vmatpush1.bf16.msra.mxu0 0
        %666 = vmatprep.subr.bf16.mxu0 0
        %667 = vmatpush1.bf16.msra.mxu0 0
        %668 = vmatprep.subr.bf16.mxu0 0
        %669 = vmatpush1.bf16.msra.mxu0 0
        %670 = vmatprep.mubr.bf16.mxu0 0
        %671 = vmatmul.mubr.bf16.gmra.mrb[0].mxu0 %v627
        %v672 = vpop.f32.mrb[0].mxu0
        %v673 = vadd.f32 0.0, %v672
        %v674 = vpop.f32.mrb[0].mxu0
        %v675 = vadd.f32 0.0, %v674
        %v676 = vpop.f32.mrb[0].mxu0
        %v677 = vpop.f32.mrb[0].mxu0
        %678 = vdwg.mxu0
        %679 = vmatprep.subr.bf16.mxu0 0
        %680 = vmatpush1.bf16.msra.mxu0 %v636
        %681 = vmatprep.subr.bf16.mxu0 0
        %682 = vmatpush1.bf16.msra.mxu0 0
        %683 = vmatprep.subr.bf16.mxu0 0
        %684 = vmatpush1.bf16.msra.mxu0 0
        %685 = vmatprep.subr.bf16.mxu0 0
        %686 = vmatpush1.bf16.msra.mxu0 0
        %687 = vmatprep.subr.bf16.mxu0 0
        %688 = vmatpush1.bf16.msra.mxu0 0
        %689 = vmatprep.subr.bf16.mxu0 0
        %690 = vmatpush1.bf16.msra.mxu0 0
        %691 = vmatprep.subr.bf16.mxu0 0
        %692 = vmatpush1.bf16.msra.mxu0 0
        %693 = vmatprep.subr.bf16.mxu0 0
        %694 = vmatpush1.bf16.msra.mxu0 0
        %695 = vmatprep.subr.bf16.mxu0 0
        %696 = vmatpush1.bf16.msra.mxu0 0
        %697 = vmatprep.subr.bf16.mxu0 0
        %698 = vmatpush1.bf16.msra.mxu0 0
        %699 = vmatprep.subr.bf16.mxu0 0
        %700 = vmatpush1.bf16.msra.mxu0 0
        %701 = vmatprep.subr.bf16.mxu0 0
        %702 = vmatpush1.bf16.msra.mxu0 0
        %703 = vmatprep.subr.bf16.mxu0 0
        %704 = vmatpush1.bf16.msra.mxu0 0
        %705 = vmatprep.subr.bf16.mxu0 0
        %706 = vmatpush1.bf16.msra.mxu0 0
        %707 = vmatprep.subr.bf16.mxu0 0
        %708 = vmatpush1.bf16.msra.mxu0 0
        %709 = vmatprep.subr.bf16.mxu0 0
        %710 = vmatpush1.bf16.msra.mxu0 0
        %711 = vmatprep.mubr.bf16.mxu0 0
        %712 = vmatmul.mubr.bf16.gmra.mrb[0].mxu0 %v627
        %v713 = vpop.f32.mrb[0].mxu0
        %v714 = vadd.f32 0.0, %v713
        %v715 = vpop.f32.mrb[0].mxu0
        %v716 = vpop.f32.mrb[0].mxu0
        %v717 = vpop.f32.mrb[0].mxu0
        %718 = vdwg.mxu0
        %v719 = vadd.f32 %v611, %v673
        %v720 = vadd.f32 %v612, %v675
        %v721 = vadd.f32 %v613, %v714
        %722 = vrot.lane.b32.xlu0 %v188, 108
        %v723 = vpop.permute.xlu0 %722
        %724 = vrot.lane.b32.xlu0 %v196, 108
        %v725 = vpop.permute.xlu0 %724
        %726 = vrot.lane.b32.xlu0 %v195, 108
        %v727 = vpop.permute.xlu0 %726
        %728 = vrot.lane.b32.xlu0 %v197, 108
        %v729 = vpop.permute.xlu0 %728
        %vm730 = vcmask 883712
        %v731 = vsel %vm730, %v723, %v725
        %v732 = vsel %vm730, %v725, %v727
        %v733 = vsel %vm730, %v727, %v729
        %v735 = vsel %vm210, %v176, 0
        %v738 = vsel %vm214, %v731, 0
        %v741 = vsel %vm214, %v732, 0
        %v744 = vsel %vm214, %v733, 0
        %746 = vmatprep.subr.bf16.mxu0 %v741
        %747 = vmatpush1.bf16.msra.mxu0 %v738
        %748 = vmatprep.subr.bf16.mxu0 0
        %749 = vmatpush1.bf16.msra.mxu0 0
        %750 = vmatprep.subr.bf16.mxu0 0
        %751 = vmatpush1.bf16.msra.mxu0 0
        %752 = vmatprep.subr.bf16.mxu0 0
        %753 = vmatpush1.bf16.msra.mxu0 0
        %754 = vmatprep.subr.bf16.mxu0 0
        %755 = vmatpush1.bf16.msra.mxu0 0
        %756 = vmatprep.subr.bf16.mxu0 0
        %757 = vmatpush1.bf16.msra.mxu0 0
        %758 = vmatprep.subr.bf16.mxu0 0
        %759 = vmatpush1.bf16.msra.mxu0 0
        %760 = vmatprep.subr.bf16.mxu0 0
        %761 = vmatpush1.bf16.msra.mxu0 0
        %762 = vmatprep.subr.bf16.mxu0 0
        %763 = vmatpush1.bf16.msra.mxu0 0
        %764 = vmatprep.subr.bf16.mxu0 0
        %765 = vmatpush1.bf16.msra.mxu0 0
        %766 = vmatprep.subr.bf16.mxu0 0
        %767 = vmatpush1.bf16.msra.mxu0 0
        %768 = vmatprep.subr.bf16.mxu0 0
        %769 = vmatpush1.bf16.msra.mxu0 0
        %770 = vmatprep.subr.bf16.mxu0 0
        %771 = vmatpush1.bf16.msra.mxu0 0
        %772 = vmatprep.subr.bf16.mxu0 0
        %773 = vmatpush1.bf16.msra.mxu0 0
        %774 = vmatprep.subr.bf16.mxu0 0
        %775 = vmatpush1.bf16.msra.mxu0 0
        %776 = vmatprep.subr.bf16.mxu0 0
        %777 = vmatpush1.bf16.msra.mxu0 0
        %778 = vmatprep.mubr.bf16.mxu0 0
        %779 = vmatmul.mubr.bf16.gmra.mrb[0].mxu0 %v735
        %v780 = vpop.f32.mrb[0].mxu0
        %v781 = vadd.f32 0.0, %v780
        %v782 = vpop.f32.mrb[0].mxu0
        %v783 = vadd.f32 0.0, %v782
        %v784 = vpop.f32.mrb[0].mxu0
        %v785 = vpop.f32.mrb[0].mxu0
        %786 = vdwg.mxu0
        %787 = vmatprep.subr.bf16.mxu0 0
        %788 = vmatpush1.bf16.msra.mxu0 %v744
        %789 = vmatprep.subr.bf16.mxu0 0
        %790 = vmatpush1.bf16.msra.mxu0 0
        %791 = vmatprep.subr.bf16.mxu0 0
        %792 = vmatpush1.bf16.msra.mxu0 0
        %793 = vmatprep.subr.bf16.mxu0 0
        %794 = vmatpush1.bf16.msra.mxu0 0
        %795 = vmatprep.subr.bf16.mxu0 0
        %796 = vmatpush1.bf16.msra.mxu0 0
        %797 = vmatprep.subr.bf16.mxu0 0
        %798 = vmatpush1.bf16.msra.mxu0 0
        %799 = vmatprep.subr.bf16.mxu0 0
        %800 = vmatpush1.bf16.msra.mxu0 0
        %801 = vmatprep.subr.bf16.mxu0 0
        %802 = vmatpush1.bf16.msra.mxu0 0
        %803 = vmatprep.subr.bf16.mxu0 0
        %804 = vmatpush1.bf16.msra.mxu0 0
        %805 = vmatprep.subr.bf16.mxu0 0
        %806 = vmatpush1.bf16.msra.mxu0 0
        %807 = vmatprep.subr.bf16.mxu0 0
        %808 = vmatpush1.bf16.msra.mxu0 0
        %809 = vmatprep.subr.bf16.mxu0 0
        %810 = vmatpush1.bf16.msra.mxu0 0
        %811 = vmatprep.subr.bf16.mxu0 0
        %812 = vmatpush1.bf16.msra.mxu0 0
        %813 = vmatprep.subr.bf16.mxu0 0
        %814 = vmatpush1.bf16.msra.mxu0 0
        %815 = vmatprep.subr.bf16.mxu0 0
        %816 = vmatpush1.bf16.msra.mxu0 0
        %817 = vmatprep.subr.bf16.mxu0 0
        %818 = vmatpush1.bf16.msra.mxu0 0
        %819 = vmatprep.mubr.bf16.mxu0 0
        %820 = vmatmul.mubr.bf16.gmra.mrb[0].mxu0 %v735
        %v821 = vpop.f32.mrb[0].mxu0
        %v822 = vadd.f32 0.0, %v821
        %v823 = vpop.f32.mrb[0].mxu0
        %v824 = vpop.f32.mrb[0].mxu0
        %v825 = vpop.f32.mrb[0].mxu0
        %826 = vdwg.mxu0
        %v827 = vadd.f32 %v719, %v781
        %v828 = vadd.f32 %v720, %v783
        %v829 = vadd.f32 %v721, %v822
        %830 = vrot.lane.b32.xlu0 %v188, 92
        %v831 = vpop.permute.xlu0 %830
        %832 = vrot.lane.b32.xlu0 %v196, 92
        %v833 = vpop.permute.xlu0 %832
        %834 = vrot.lane.b32.xlu0 %v195, 92
        %v835 = vpop.permute.xlu0 %834
        %836 = vrot.lane.b32.xlu0 %v197, 92
        %v837 = vpop.permute.xlu0 %836
        %vm838 = vcmask 752640
        %v839 = vsel %vm838, %v831, %v833
        %v840 = vsel %vm838, %v833, %v835
        %v841 = vsel %vm838, %v835, %v837
        %v843 = vsel %vm210, %v177, 0
        %v846 = vsel %vm214, %v839, 0
        %v849 = vsel %vm214, %v840, 0
        %v852 = vsel %vm214, %v841, 0
        %854 = vmatprep.subr.bf16.mxu0 %v849
        %855 = vmatpush1.bf16.msra.mxu0 %v846
        %856 = vmatprep.subr.bf16.mxu0 0
        %857 = vmatpush1.bf16.msra.mxu0 0
        %858 = vmatprep.subr.bf16.mxu0 0
        %859 = vmatpush1.bf16.msra.mxu0 0
        %860 = vmatprep.subr.bf16.mxu0 0
        %861 = vmatpush1.bf16.msra.mxu0 0
        %862 = vmatprep.subr.bf16.mxu0 0
        %863 = vmatpush1.bf16.msra.mxu0 0
        %864 = vmatprep.subr.bf16.mxu0 0
        %865 = vmatpush1.bf16.msra.mxu0 0
        %866 = vmatprep.subr.bf16.mxu0 0
        %867 = vmatpush1.bf16.msra.mxu0 0
        %868 = vmatprep.subr.bf16.mxu0 0
        %869 = vmatpush1.bf16.msra.mxu0 0
        %870 = vmatprep.subr.bf16.mxu0 0
        %871 = vmatpush1.bf16.msra.mxu0 0
        %872 = vmatprep.subr.bf16.mxu0 0
        %873 = vmatpush1.bf16.msra.mxu0 0
        %874 = vmatprep.subr.bf16.mxu0 0
        %875 = vmatpush1.bf16.msra.mxu0 0
        %876 = vmatprep.subr.bf16.mxu0 0
        %877 = vmatpush1.bf16.msra.mxu0 0
        %878 = vmatprep.subr.bf16.mxu0 0
        %879 = vmatpush1.bf16.msra.mxu0 0
        %880 = vmatprep.subr.bf16.mxu0 0
        %881 = vmatpush1.bf16.msra.mxu0 0
        %882 = vmatprep.subr.bf16.mxu0 0
        %883 = vmatpush1.bf16.msra.mxu0 0
        %884 = vmatprep.subr.bf16.mxu0 0
        %885 = vmatpush1.bf16.msra.mxu0 0
        %886 = vmatprep.mubr.bf16.mxu0 0
        %887 = vmatmul.mubr.bf16.gmra.mrb[0].mxu0 %v843
        %v888 = vpop.f32.mrb[0].mxu0
        %v889 = vadd.f32 0.0, %v888
        %v890 = vpop.f32.mrb[0].mxu0
        %v891 = vadd.f32 0.0, %v890
        %v892 = vpop.f32.mrb[0].mxu0
        %v893 = vpop.f32.mrb[0].mxu0
        %894 = vdwg.mxu0
        %895 = vmatprep.subr.bf16.mxu0 0
        %896 = vmatpush1.bf16.msra.mxu0 %v852
        %897 = vmatprep.subr.bf16.mxu0 0
        %898 = vmatpush1.bf16.msra.mxu0 0
        %899 = vmatprep.subr.bf16.mxu0 0
        %900 = vmatpush1.bf16.msra.mxu0 0
        %901 = vmatprep.subr.bf16.mxu0 0
        %902 = vmatpush1.bf16.msra.mxu0 0
        %903 = vmatprep.subr.bf16.mxu0 0
        %904 = vmatpush1.bf16.msra.mxu0 0
        %905 = vmatprep.subr.bf16.mxu0 0
        %906 = vmatpush1.bf16.msra.mxu0 0
        %907 = vmatprep.subr.bf16.mxu0 0
        %908 = vmatpush1.bf16.msra.mxu0 0
        %909 = vmatprep.subr.bf16.mxu0 0
        %910 = vmatpush1.bf16.msra.mxu0 0
        %911 = vmatprep.subr.bf16.mxu0 0
        %912 = vmatpush1.bf16.msra.mxu0 0
        %913 = vmatprep.subr.bf16.mxu0 0
        %914 = vmatpush1.bf16.msra.mxu0 0
        %915 = vmatprep.subr.bf16.mxu0 0
        %916 = vmatpush1.bf16.msra.mxu0 0
        %917 = vmatprep.subr.bf16.mxu0 0
        %918 = vmatpush1.bf16.msra.mxu0 0
        %919 = vmatprep.subr.bf16.mxu0 0
        %920 = vmatpush1.bf16.msra.mxu0 0
        %921 = vmatprep.subr.bf16.mxu0 0
        %922 = vmatpush1.bf16.msra.mxu0 0
        %923 = vmatprep.subr.bf16.mxu0 0
        %924 = vmatpush1.bf16.msra.mxu0 0
        %925 = vmatprep.subr.bf16.mxu0 0
        %926 = vmatpush1.bf16.msra.mxu0 0
        %927 = vmatprep.mubr.bf16.mxu0 0
        %928 = vmatmul.mubr.bf16.gmra.mrb[0].mxu0 %v843
        %v929 = vpop.f32.mrb[0].mxu0
        %v930 = vadd.f32 0.0, %v929
        %v931 = vpop.f32.mrb[0].mxu0
        %v932 = vpop.f32.mrb[0].mxu0
        %v933 = vpop.f32.mrb[0].mxu0
        %934 = vdwg.mxu0
        %v935 = vadd.f32 %v827, %v889
        %v936 = vadd.f32 %v828, %v891
        %v937 = vadd.f32 %v829, %v930
        %938 = vrot.lane.b32.xlu0 %v188, 91
        %v939 = vpop.permute.xlu0 %938
        %940 = vrot.lane.b32.xlu0 %v196, 91
        %v941 = vpop.permute.xlu0 %940
        %942 = vrot.lane.b32.xlu0 %v195, 91
        %v943 = vpop.permute.xlu0 %942
        %944 = vrot.lane.b32.xlu0 %v197, 91
        %v945 = vpop.permute.xlu0 %944
        %vm946 = vcmask 744448
        %v947 = vsel %vm946, %v939, %v941
        %v948 = vsel %vm946, %v941, %v943
        %v949 = vsel %vm946, %v943, %v945
        %v951 = vsel %vm210, %v178, 0
        %v954 = vsel %vm214, %v947, 0
        %v957 = vsel %vm214, %v948, 0
        %v960 = vsel %vm214, %v949, 0
        %962 = vmatprep.subr.bf16.mxu0 %v957
        %963 = vmatpush1.bf16.msra.mxu0 %v954
        %964 = vmatprep.subr.bf16.mxu0 0
        %965 = vmatpush1.bf16.msra.mxu0 0
        %966 = vmatprep.subr.bf16.mxu0 0
        %967 = vmatpush1.bf16.msra.mxu0 0
        %968 = vmatprep.subr.bf16.mxu0 0
        %969 = vmatpush1.bf16.msra.mxu0 0
        %970 = vmatprep.subr.bf16.mxu0 0
        %971 = vmatpush1.bf16.msra.mxu0 0
        %972 = vmatprep.subr.bf16.mxu0 0
        %973 = vmatpush1.bf16.msra.mxu0 0
        %974 = vmatprep.subr.bf16.mxu0 0
        %975 = vmatpush1.bf16.msra.mxu0 0
        %976 = vmatprep.subr.bf16.mxu0 0
        %977 = vmatpush1.bf16.msra.mxu0 0
        %978 = vmatprep.subr.bf16.mxu0 0
        %979 = vmatpush1.bf16.msra.mxu0 0
        %980 = vmatprep.subr.bf16.mxu0 0
        %981 = vmatpush1.bf16.msra.mxu0 0
        %982 = vmatprep.subr.bf16.mxu0 0
        %983 = vmatpush1.bf16.msra.mxu0 0
        %984 = vmatprep.subr.bf16.mxu0 0
        %985 = vmatpush1.bf16.msra.mxu0 0
        %986 = vmatprep.subr.bf16.mxu0 0
        %987 = vmatpush1.bf16.msra.mxu0 0
        %988 = vmatprep.subr.bf16.mxu0 0
        %989 = vmatpush1.bf16.msra.mxu0 0
        %990 = vmatprep.subr.bf16.mxu0 0
        %991 = vmatpush1.bf16.msra.mxu0 0
        %992 = vmatprep.subr.bf16.mxu0 0
        %993 = vmatpush1.bf16.msra.mxu0 0
        %994 = vmatprep.mubr.bf16.mxu0 0
        %995 = vmatmul.mubr.bf16.gmra.mrb[0].mxu0 %v951
        %v996 = vpop.f32.mrb[0].mxu0
        %v997 = vadd.f32 0.0, %v996
        %v998 = vpop.f32.mrb[0].mxu0
        %v999 = vadd.f32 0.0, %v998
        %v1000 = vpop.f32.mrb[0].mxu0
        %v1001 = vpop.f32.mrb[0].mxu0
        %1002 = vdwg.mxu0
        %1003 = vmatprep.subr.bf16.mxu0 0
        %1004 = vmatpush1.bf16.msra.mxu0 %v960
        %1005 = vmatprep.subr.bf16.mxu0 0
        %1006 = vmatpush1.bf16.msra.mxu0 0
        %1007 = vmatprep.subr.bf16.mxu0 0
        %1008 = vmatpush1.bf16.msra.mxu0 0
        %1009 = vmatprep.subr.bf16.mxu0 0
        %1010 = vmatpush1.bf16.msra.mxu0 0
        %1011 = vmatprep.subr.bf16.mxu0 0
        %1012 = vmatpush1.bf16.msra.mxu0 0
        %1013 = vmatprep.subr.bf16.mxu0 0
        %1014 = vmatpush1.bf16.msra.mxu0 0
        %1015 = vmatprep.subr.bf16.mxu0 0
        %1016 = vmatpush1.bf16.msra.mxu0 0
        %1017 = vmatprep.subr.bf16.mxu0 0
        %1018 = vmatpush1.bf16.msra.mxu0 0
        %1019 = vmatprep.subr.bf16.mxu0 0
        %1020 = vmatpush1.bf16.msra.mxu0 0
        %1021 = vmatprep.subr.bf16.mxu0 0
        %1022 = vmatpush1.bf16.msra.mxu0 0
        %1023 = vmatprep.subr.bf16.mxu0 0
        %1024 = vmatpush1.bf16.msra.mxu0 0
        %1025 = vmatprep.subr.bf16.mxu0 0
        %1026 = vmatpush1.bf16.msra.mxu0 0
        %1027 = vmatprep.subr.bf16.mxu0 0
        %1028 = vmatpush1.bf16.msra.mxu0 0
        %1029 = vmatprep.subr.bf16.mxu0 0
        %1030 = vmatpush1.bf16.msra.mxu0 0
        %1031 = vmatprep.subr.bf16.mxu0 0
        %1032 = vmatpush1.bf16.msra.mxu0 0
        %1033 = vmatprep.subr.bf16.mxu0 0
        %1034 = vmatpush1.bf16.msra.mxu0 0
        %1035 = vmatprep.mubr.bf16.mxu0 0
        %1036 = vmatmul.mubr.bf16.gmra.mrb[0].mxu0 %v951
        %v1037 = vpop.f32.mrb[0].mxu0
        %v1038 = vadd.f32 0.0, %v1037
        %v1039 = vpop.f32.mrb[0].mxu0
        %v1040 = vpop.f32.mrb[0].mxu0
        %v1041 = vpop.f32.mrb[0].mxu0
        %1042 = vdwg.mxu0
        %v1043 = vadd.f32 %v935, %v997
        %v1044 = vadd.f32 %v936, %v999
        %v1045 = vadd.f32 %v937, %v1038
        %1046 = vrot.lane.b32.xlu0 %v188, 90
        %v1047 = vpop.permute.xlu0 %1046
        %1048 = vrot.lane.b32.xlu0 %v196, 90
        %v1049 = vpop.permute.xlu0 %1048
        %1050 = vrot.lane.b32.xlu0 %v195, 90
        %v1051 = vpop.permute.xlu0 %1050
        %1052 = vrot.lane.b32.xlu0 %v197, 90
        %v1053 = vpop.permute.xlu0 %1052
        %vm1054 = vcmask 736256
        %v1055 = vsel %vm1054, %v1047, %v1049
        %v1056 = vsel %vm1054, %v1049, %v1051
        %v1057 = vsel %vm1054, %v1051, %v1053
        %v1059 = vsel %vm210, %v179, 0
        %v1062 = vsel %vm214, %v1055, 0
        %v1065 = vsel %vm214, %v1056, 0
        %v1068 = vsel %vm214, %v1057, 0
        %1070 = vmatprep.subr.bf16.mxu0 %v1065
        %1071 = vmatpush1.bf16.msra.mxu0 %v1062
        %1072 = vmatprep.subr.bf16.mxu0 0
        %1073 = vmatpush1.bf16.msra.mxu0 0
        %1074 = vmatprep.subr.bf16.mxu0 0
        %1075 = vmatpush1.bf16.msra.mxu0 0
        %1076 = vmatprep.subr.bf16.mxu0 0
        %1077 = vmatpush1.bf16.msra.mxu0 0
        %1078 = vmatprep.subr.bf16.mxu0 0
        %1079 = vmatpush1.bf16.msra.mxu0 0
        %1080 = vmatprep.subr.bf16.mxu0 0
        %1081 = vmatpush1.bf16.msra.mxu0 0
        %1082 = vmatprep.subr.bf16.mxu0 0
        %1083 = vmatpush1.bf16.msra.mxu0 0
        %1084 = vmatprep.subr.bf16.mxu0 0
        %1085 = vmatpush1.bf16.msra.mxu0 0
        %1086 = vmatprep.subr.bf16.mxu0 0
        %1087 = vmatpush1.bf16.msra.mxu0 0
        %1088 = vmatprep.subr.bf16.mxu0 0
        %1089 = vmatpush1.bf16.msra.mxu0 0
        %1090 = vmatprep.subr.bf16.mxu0 0
        %1091 = vmatpush1.bf16.msra.mxu0 0
        %1092 = vmatprep.subr.bf16.mxu0 0
        %1093 = vmatpush1.bf16.msra.mxu0 0
        %1094 = vmatprep.subr.bf16.mxu0 0
        %1095 = vmatpush1.bf16.msra.mxu0 0
        %1096 = vmatprep.subr.bf16.mxu0 0
        %1097 = vmatpush1.bf16.msra.mxu0 0
        %1098 = vmatprep.subr.bf16.mxu0 0
        %1099 = vmatpush1.bf16.msra.mxu0 0
        %1100 = vmatprep.subr.bf16.mxu0 0
        %1101 = vmatpush1.bf16.msra.mxu0 0
        %1102 = vmatprep.mubr.bf16.mxu0 0
        %1103 = vmatmul.mubr.bf16.gmra.mrb[0].mxu0 %v1059
        %v1104 = vpop.f32.mrb[0].mxu0
        %v1105 = vadd.f32 0.0, %v1104
        %v1106 = vpop.f32.mrb[0].mxu0
        %v1107 = vadd.f32 0.0, %v1106
        %v1108 = vpop.f32.mrb[0].mxu0
        %v1109 = vpop.f32.mrb[0].mxu0
        %1110 = vdwg.mxu0
        %1111 = vmatprep.subr.bf16.mxu0 0
        %1112 = vmatpush1.bf16.msra.mxu0 %v1068
        %1113 = vmatprep.subr.bf16.mxu0 0
        %1114 = vmatpush1.bf16.msra.mxu0 0
        %1115 = vmatprep.subr.bf16.mxu0 0
        %1116 = vmatpush1.bf16.msra.mxu0 0
        %1117 = vmatprep.subr.bf16.mxu0 0
        %1118 = vmatpush1.bf16.msra.mxu0 0
        %1119 = vmatprep.subr.bf16.mxu0 0
        %1120 = vmatpush1.bf16.msra.mxu0 0
        %1121 = vmatprep.subr.bf16.mxu0 0
        %1122 = vmatpush1.bf16.msra.mxu0 0
        %1123 = vmatprep.subr.bf16.mxu0 0
        %1124 = vmatpush1.bf16.msra.mxu0 0
        %1125 = vmatprep.subr.bf16.mxu0 0
        %1126 = vmatpush1.bf16.msra.mxu0 0
        %1127 = vmatprep.subr.bf16.mxu0 0
        %1128 = vmatpush1.bf16.msra.mxu0 0
        %1129 = vmatprep.subr.bf16.mxu0 0
        %1130 = vmatpush1.bf16.msra.mxu0 0
        %1131 = vmatprep.subr.bf16.mxu0 0
        %1132 = vmatpush1.bf16.msra.mxu0 0
        %1133 = vmatprep.subr.bf16.mxu0 0
        %1134 = vmatpush1.bf16.msra.mxu0 0
        %1135 = vmatprep.subr.bf16.mxu0 0
        %1136 = vmatpush1.bf16.msra.mxu0 0
        %1137 = vmatprep.subr.bf16.mxu0 0
        %1138 = vmatpush1.bf16.msra.mxu0 0
        %1139 = vmatprep.subr.bf16.mxu0 0
        %1140 = vmatpush1.bf16.msra.mxu0 0
        %1141 = vmatprep.subr.bf16.mxu0 0
        %1142 = vmatpush1.bf16.msra.mxu0 0
        %1143 = vmatprep.mubr.bf16.mxu0 0
        %1144 = vmatmul.mubr.bf16.gmra.mrb[0].mxu0 %v1059
        %v1145 = vpop.f32.mrb[0].mxu0
        %v1146 = vadd.f32 0.0, %v1145
        %v1147 = vpop.f32.mrb[0].mxu0
        %v1148 = vpop.f32.mrb[0].mxu0
        %v1149 = vpop.f32.mrb[0].mxu0
        %1150 = vdwg.mxu0
        %v1151 = vadd.f32 %v1043, %v1105
        %v1152 = vadd.f32 %v1044, %v1107
        %v1153 = vadd.f32 %v1045, %v1146
        %v1154 = vld [vmem:[%s2] sm:$0xff]
        %1156 = vset.pattern.permute.xlu0 0
        %1157 = vperm.xlu0 %1156, %v1154
        %v1158 = vpop.permute.xlu0 %1157
        %v1160 = vadd.f32 %v1151, %v1158
        %v1161 = vadd.f32 %v1152, %v1158
        %v1162 = vadd.f32 %v1153, %v1158
        %1163 = vst [vmem:[%s163] sm:$0xff] %v1160
        %1164 = vst [vmem:[%s163 + $0x8] sm:$0xff] %v1161
        %1165 = vst [vmem:[%s163 + $0x10] sm:$0xff] %v1162
        %s1166 = sand.u32 %s93, 1
        %s1167 = scalar_lea.sflag [#allocation3], %s1166
        %s1168 = sand.u32 %s93, 1
        %s1169 = smul.addr %s1168, 24
        %s1170 = scalar_lea.vmem [#allocation2], %s1169
        // Predicated region
        $region33: #{tpu_custom_call.1} parent=31 // pred_check
          %p1171 = pneg %p103
        $region34: #{tpu_custom_call.1} parent=31 // pred_check_branch
          %1173 = sbr.rel (%p1171) target = $region36
        $region35: #{tpu_custom_call.1} parent=31 // pred_region
          %s1175 = ssub.s32 384, 384
          %1176 = vsyncadd %s1167, %s1175
          %s1177 = smul.addr %s17, 3
          %s1178 = smul.addr %s1177, 128
          %s1179 = scalar_lea.hbm %s3, %s1178
          %s1181 = sshll.u32 %s1170, 4
          %s1182 = int_to_ptr.vmem [resolvable:$true] %s1181
          %1184 = dma.vmem_to_hbm [thread:$0]  %s1182, 384, %s1179, %s1167
        $region36: #{tpu_custom_call.1} parent=31 // pred_fallthru
          _
      $region32: #{tpu_custom_call.1} parent=5 // pred_fallthru
        _
      %p1185 = scmp.le.s32.totalorder 2, %s12
      // Predicated region
      $region37: #{tpu_custom_call.1} parent=5 // pred_check
        %p1186 = pneg %p1185
      $region38: #{tpu_custom_call.1} parent=5 // pred_check_branch
        %1188 = sbr.rel (%p1186) target = $region40
      $region39: #{tpu_custom_call.1} parent=5 // pred_region
        %s1189 = ssub.s32 %s12, 2
        // Predicated region
        $region41: #{tpu_custom_call.1} parent=39 // pred_check
          %p1190 = pneg %p109
        $region42: #{tpu_custom_call.1} parent=39 // pred_check_branch
          %1192 = sbr.rel (%p1190) target = $region44
        $region43: #{tpu_custom_call.1} parent=39 // pred_region
          %s1193 = sand.u32 %s94, 1
          %s1194 = scalar_lea.sflag [#allocation3], %s1193
          %s1195 = sand.u32 %s94, 1
          %s1196 = smul.addr %s1195, 24
          %s1197 = scalar_lea.vmem [#allocation2], %s1196
          %1198 = dma.done %s1194, 384
        $region44: #{tpu_custom_call.1} parent=39 // pred_fallthru
          _
      $region40: #{tpu_custom_call.1} parent=5 // pred_fallthru
        _
    $region6: #{tpu_custom_call.1} parent=1 // loop_footer
      %s16 = sadd.s32 1, %s12
    $region7: #{tpu_custom_call.1} parent=1 // loop_footer_branch
      %11 = sbr.rel target = $region3
    $region8: #{tpu_custom_call.1} parent=1 // loop_exit
      _
    %1199 = vsyncpa [#allocation3], 1
    %s1200 = scalar_lea.sflag [#allocation3], 1
    %1201 = vsyncpa %s1200, 1

</llo_original>
